<compile_context>
chip_gen: v7x
topology: tpu7x:2x2x1
jax: 0.10.0
libtpu: 0.0.40
codegen_flags: <defaults>
</compile_context>

<pallas_src>
from functools import partial

import jax
import jax.numpy as jnp
from jax.experimental import pallas as pl
from jax.experimental.pallas import tpu as pltpu


# =============================================================================
# Host-side layout plumbing (no compute): patch extraction + sin-cos pos embed
# =============================================================================
def patchify(imgs, p):
    """(B, C, H, W) -> (B, L, p*p*C); equals the stride==kernel conv input."""
    B, C, H, W = imgs.shape
    h, w = H // p, W // p
    x = imgs.reshape(B, C, h, p, w, p)
    x = jnp.transpose(x, (0, 2, 4, 3, 5, 1))          # n h w p q c
    return x.reshape(B, h * w, p * p * C)


def _sincos_1d(embed_dim, pos):
    omega = jnp.arange(embed_dim // 2, dtype=jnp.float32) / (embed_dim / 2.0)
    omega = 1.0 / (10000.0 ** omega)
    out = pos.reshape(-1)[:, None] * omega[None, :]
    return jnp.concatenate([jnp.sin(out), jnp.cos(out)], axis=1)


def get_2d_sincos_pos_embed(embed_dim, grid_h, grid_w):
    ys, xs = jnp.meshgrid(jnp.arange(grid_h, dtype=jnp.float32),
                          jnp.arange(grid_w, dtype=jnp.float32), indexing="ij")
    emb_h = _sincos_1d(embed_dim // 2, ys)
    emb_w = _sincos_1d(embed_dim // 2, xs)
    pos = jnp.concatenate([emb_h, emb_w], axis=1)       # (L, D)
    cls = jnp.zeros((1, embed_dim), jnp.float32)
    return jnp.concatenate([cls, pos], axis=0)          # (L+1, D)


# =============================================================================
# Kernel 1: patch embedding (bf16 matmul + folded bias/pos/cls additive table)
# =============================================================================
def _patch_embed_kernel(xp_ref, w_ref, add_ref, o_ref):
    # xp_ref : (TB, L, P) bf16 patches
    # w_ref  : (P, D)     bf16 conv-as-linear weight (pre-transposed)
    # add_ref: (S_pad, D) f32  row0 = cls_token+pos[0]; rows 1..L = pos+bias; rest 0
    # o_ref  : (TB, S_pad, D) f32
    TB, L, P = xp_ref.shape
    S_pad, D = add_ref.shape
    y = jnp.dot(xp_ref[...].reshape(TB * L, P), w_ref[...],
                preferred_element_type=jnp.float32).reshape(TB, L, D)
    add = add_ref[...]
    cls_rows = jnp.broadcast_to(add[0:1, :][None, :, :], (TB, 1, D))
    body = y + add[1:1 + L, :][None, :, :]
    parts = [cls_rows, body]
    if S_pad > 1 + L:
        parts.append(jnp.zeros((TB, S_pad - 1 - L, D), jnp.float32))
    o_ref[...] = jnp.concatenate(parts, axis=1)


def patch_embed_forward(patches_bf16, w_bf16, tok_add, *, tb):
    B, L, P = patches_bf16.shape
    S_pad, D = tok_add.shape
    assert B % tb == 0
    return pl.pallas_call(
        _patch_embed_kernel,
        out_shape=jax.ShapeDtypeStruct((B, S_pad, D), jnp.float32),
        grid=(B // tb,),
        in_specs=[
            pl.BlockSpec((tb, L, P), lambda i: (i, 0, 0)),
            pl.BlockSpec((P, D), lambda i: (0, 0)),
            pl.BlockSpec((S_pad, D), lambda i: (0, 0)),
        ],
        out_specs=pl.BlockSpec((tb, S_pad, D), lambda i: (i, 0, 0)),
        compiler_params=pltpu.CompilerParams(dimension_semantics=("parallel",)),
    )(patches_bf16, w_bf16, tok_add)


# =============================================================================
# Kernel 2: all ViT blocks + final LayerNorm(cls) in ONE fused pallas_call
# =============================================================================
def _ln_rows(x, g, b, eps):
    mu = jnp.mean(x, axis=-1, keepdims=True)
    xc = x - mu
    var = jnp.mean(xc * xc, axis=-1, keepdims=True)
    return xc * jax.lax.rsqrt(var + eps) * g + b


def _encoder_blocks_kernel(x_ref, ln1_g_ref, ln1_b_ref, wqkv_ref, bqkv_ref,
                           wproj_ref, bproj_ref, ln2_g_ref, ln2_b_ref,
                           wfc1_ref, bfc1_ref, wfc2_ref, bfc2_ref,
                           nrm_g_ref, nrm_b_ref, emb_ref, x_sc, ao_sc,
                           *, num_heads, seq_valid, eps):
    layer = pl.program_id(1)
    n_layers = pl.num_programs(1)
    TB, S_pad, D = x_sc.shape
    R = TB * S_pad
    dh = D // num_heads
    scale = float(dh) ** -0.5
    bf16 = jnp.bfloat16

    # layer 0: load this batch tile's sequence into the carried VMEM scratch
    @pl.when(layer == 0)
    def _():
        x_sc[...] = x_ref[...]

    x = x_sc[...].reshape(R, D)                          # (R, D) f32

    # ---- LayerNorm 1 + fused QKV projection (bf16 operands, f32 accumulate)
    xn = _ln_rows(x, ln1_g_ref[...], ln1_b_ref[...], eps)
    qkv = jnp.dot(xn.astype(bf16), wqkv_ref[...],
                  preferred_element_type=jnp.float32) + bqkv_ref[...]
    q = qkv[:, 0:D] * scale                              # scale folded into q once
    k = qkv[:, D:2 * D]
    v = qkv[:, 2 * D:3 * D]

    # additive mask for padded key columns (seq_valid is a static Python int)
    col = jax.lax.broadcasted_iota(jnp.int32, (1, 1, S_pad), 2)
    key_mask = jnp.where(col < seq_valid, 0.0, -1e30).astype(jnp.float32)

    # ---- multi-head attention; per-head outputs assembled into VMEM scratch
    for h in range(num_heads):                           # small static unroll
        sl = slice(h * dh, (h + 1) * dh)
        qh = q[:, sl].reshape(TB, S_pad, dh).astype(bf16)
        kh = k[:, sl].reshape(TB, S_pad, dh).astype(bf16)
        vh = v[:, sl].reshape(TB, S_pad, dh).astype(bf16)
        att = jnp.einsum("bqd,bkd->bqk", qh, kh,
                         preferred_element_type=jnp.float32) + key_mask
        att = att - jnp.max(att, axis=-1, keepdims=True)
        p = jnp.exp(att)
        p = p * pl.reciprocal(jnp.sum(p, axis=-1, keepdims=True), approx=True)
        oh = jnp.einsum("bqk,bkd->bqd", p.astype(bf16), vh,
                        preferred_element_type=jnp.float32)
        ao_sc[:, sl] = oh.reshape(R, dh)

    # ---- single lane-dense output projection (K = D) + residual
    attn = jnp.dot(ao_sc[...].astype(bf16), wproj_ref[...],
                   preferred_element_type=jnp.float32) + bproj_ref[...]
    x = x + attn

    # ---- LayerNorm 2 + MLP (fc1 -> GELU -> fc2) + residual
    xn2 = _ln_rows(x, ln2_g_ref[...], ln2_b_ref[...], eps)
    h1 = jnp.dot(xn2.astype(bf16), wfc1_ref[...],
                 preferred_element_type=jnp.float32) + bfc1_ref[...]
    # TODO(synk): PyTorch nn.GELU() defaults to exact erf; tanh approximation is
    # used for robust Mosaic lowering (the JAX reference below matches it).
    h1 = jax.nn.gelu(h1, approximate=True)
    x = x + jnp.dot(h1.astype(bf16), wfc2_ref[...],
                    preferred_element_type=jnp.float32) + bfc2_ref[...]

    x_sc[...] = x.reshape(TB, S_pad, D)

    # ---- last layer: final LayerNorm on the cls rows, emit (TB, 1, D) embedding
    @pl.when(layer == n_layers - 1)
    def _():
        cls = x.reshape(TB, S_pad, D)[:, 0, :]           # (TB, D)
        emb = _ln_rows(cls, nrm_g_ref[...], nrm_b_ref[...], eps)
        emb_ref[...] = emb.reshape(TB, 1, D)


def encoder_blocks_forward(x, blk, norm_g, norm_b, *, num_heads, seq_valid,
                           eps, tb):
    B, S_pad, D = x.shape
    depth = blk["w_qkv"].shape[0]
    Hm = blk["w_fc1"].shape[2]
    assert B % tb == 0
    bf16 = jnp.bfloat16

    def w_spec(shape):                                   # stacked per-layer param
        return pl.BlockSpec(shape, lambda b, l: (l, 0, 0))

    emb = pl.pallas_call(
        partial(_encoder_blocks_kernel, num_heads=num_heads,
                seq_valid=seq_valid, eps=eps),
        out_shape=jax.ShapeDtypeStruct((B, 1, D), jnp.float32),
        grid=(B // tb, depth),
        in_specs=[
            pl.BlockSpec((tb, S_pad, D), lambda b, l: (b, 0, 0)),   # x (per batch tile)
            w_spec((None, 1, D)), w_spec((None, 1, D)),             # ln1 g/b
            w_spec((None, D, 3 * D)), w_spec((None, 1, 3 * D)),     # qkv w/b
            w_spec((None, D, D)), w_spec((None, 1, D)),             # proj w/b
            w_spec((None, 1, D)), w_spec((None, 1, D)),             # ln2 g/b
            w_spec((None, D, Hm)), w_spec((None, 1, Hm)),           # fc1 w/b
            w_spec((None, Hm, D)), w_spec((None, 1, D)),            # fc2 w/b
            pl.BlockSpec((1, D), lambda b, l: (0, 0)),              # final norm g
            pl.BlockSpec((1, D), lambda b, l: (0, 0)),              # final norm b
        ],
        out_specs=pl.BlockSpec((tb, 1, D), lambda b, l: (b, 0, 0)),
        scratch_shapes=[pltpu.VMEM((tb, S_pad, D), jnp.float32),    # carried x
                        pltpu.VMEM((tb * S_pad, D), jnp.float32)],  # head outputs
        compiler_params=pltpu.CompilerParams(
            dimension_semantics=("parallel", "arbitrary")),
    )(x,
      blk["ln1_g"], blk["ln1_b"],
      blk["w_qkv"].astype(bf16), blk["b_qkv"],
      blk["w_proj"].astype(bf16), blk["b_proj"],
      blk["ln2_g"], blk["ln2_b"],
      blk["w_fc1"].astype(bf16), blk["b_fc1"],
      blk["w_fc2"].astype(bf16), blk["b_fc2"],
      norm_g, norm_b)
    return emb.reshape(B, D)


# =============================================================================
# Full forward (== MaskedAutoencoderViT.forward)
# =============================================================================
def mae_encoder_forward(imgs, params, *, patch_size, num_heads, eps=1e-6, tb=2):
    patches = patchify(imgs, patch_size).astype(jnp.bfloat16)   # layout only
    x = patch_embed_forward(patches, params["patch_w"].astype(jnp.bfloat16),
                            params["tok_add"], tb=tb)
    seq_valid = patches.shape[1] + 1                            # real tokens
    return encoder_blocks_forward(x, params["blocks"], params["norm_g"],
                                  params["norm_b"], num_heads=num_heads,
                                  seq_valid=seq_valid, eps=eps, tb=tb)


# =============================================================================
# Pure-JAX reference (same bf16 matmul operands as the kernel, f32 elsewhere)
# =============================================================================
def _layernorm_ref(x, g, b, eps):
    mu = jnp.mean(x, axis=-1, keepdims=True)
    xc = x - mu
    var = jnp.mean(xc * xc, axis=-1, keepdims=True)
    return xc * jax.lax.rsqrt(var + eps) * g + b


def mae_encoder_forward_ref(imgs, params, *, patch_size, num_heads, eps=1e-6):
    bf = lambda a: a.astype(jnp.bfloat16)
    patches = patchify(imgs, patch_size)                        # (B, L, P)
    B, L, P = patches.shape
    D = params["patch_w"].shape[1]
    x = jnp.dot(bf(patches), bf(params["patch_w"]),
                preferred_element_type=jnp.float32)
    x = x + params["patch_b"] + params["pos_tokens"]
    cls = jnp.broadcast_to(params["cls_plus"][None], (B, 1, D))
    x = jnp.concatenate([cls, x], axis=1)                       # (B, S, D)
    blk = params["blocks"]
    depth = blk["w_qkv"].shape[0]
    dh = D // num_heads
    for l in range(depth):
        S = x.shape[1]
        xn = _layernorm_ref(x, blk["ln1_g"][l], blk["ln1_b"][l], eps)
        qkv = jnp.dot(bf(xn), bf(blk["w_qkv"][l]),
                      preferred_element_type=jnp.float32) + blk["b_qkv"][l]
        qkv = qkv.reshape(B, S, 3, num_heads, dh).transpose(2, 0, 3, 1, 4)
        q, k, v = qkv[0] * (dh ** -0.5), qkv[1], qkv[2]
        att = jnp.einsum("bhqd,bhkd->bhqk", bf(q), bf(k),
                         preferred_element_type=jnp.float32)
        att = jax.nn.softmax(att, axis=-1)
        out = jnp.einsum("bhqk,bhkd->bhqd", bf(att), bf(v),
                         preferred_element_type=jnp.float32)
        out = out.transpose(0, 2, 1, 3).reshape(B, S, D)
        x = x + jnp.dot(bf(out), bf(blk["w_proj"][l]),
                        preferred_element_type=jnp.float32) + blk["b_proj"][l]
        xn2 = _layernorm_ref(x, blk["ln2_g"][l], blk["ln2_b"][l], eps)
        h1 = jnp.dot(bf(xn2), bf(blk["w_fc1"][l]),
                     preferred_element_type=jnp.float32) + blk["b_fc1"][l]
        h1 = jax.nn.gelu(h1, approximate=True)
        x = x + jnp.dot(bf(h1), bf(blk["w_fc2"][l]),
                        preferred_element_type=jnp.float32) + blk["b_fc2"][l]
    return _layernorm_ref(x[:, 0, :], params["norm_g"], params["norm_b"], eps)


# =============================================================================
# Deterministic parameter construction (mimics the PyTorch inits)
# =============================================================================
def init_mae_params(key, *, img_size, patch_size, in_chans, embed_dim, depth,
                    num_heads, mlp_ratio):
    D = embed_dim
    P = patch_size * patch_size * in_chans
    g = img_size // patch_size
    L = g * g
    S_pad = ((L + 1 + 7) // 8) * 8
    Hm = int(D * mlp_ratio)
    keys = jax.random.split(key, 2 + 4 * depth)
    ki = iter(keys)

    def xavier(k, fan_out, fan_in):
        bound = (6.0 / (fan_in + fan_out)) ** 0.5
        return jax.random.uniform(k, (fan_out, fan_in), minval=-bound,
                                  maxval=bound, dtype=jnp.float32)

    params = {}
    params["patch_w"] = xavier(next(ki), D, P).T                 # (P, D)
    params["patch_b"] = jnp.zeros((1, D), jnp.float32)
    pos = get_2d_sincos_pos_embed(D, g, g)                       # (L+1, D)
    cls_tok = 0.02 * jax.random.normal(next(ki), (1, D), dtype=jnp.float32)
    params["cls_plus"] = cls_tok + pos[0:1]                      # cls + pos[0]
    params["pos_tokens"] = pos[1:]                               # (L, D)
    # Folded additive table for the patch-embed kernel (padded to S_pad rows):
    #   row 0    : cls_token + pos[0]      (no conv bias on the cls slot)
    #   rows 1..L: pos[i] + conv bias
    #   rest     : 0 (padding rows)
    params["tok_add"] = jnp.concatenate(
        [params["cls_plus"],
         params["pos_tokens"] + params["patch_b"],
         jnp.zeros((S_pad - 1 - L, D), jnp.float32)], axis=0)
    params["norm_g"] = jnp.ones((1, D), jnp.float32)
    params["norm_b"] = jnp.zeros((1, D), jnp.float32)

    per_layer = []
    for _ in range(depth):
        per_layer.append(dict(
            ln1_g=jnp.ones((1, D), jnp.float32), ln1_b=jnp.zeros((1, D), jnp.float32),
            w_qkv=xavier(next(ki), 3 * D, D).T, b_qkv=jnp.zeros((1, 3 * D), jnp.float32),
            w_proj=xavier(next(ki), D, D).T, b_proj=jnp.zeros((1, D), jnp.float32),
            ln2_g=jnp.ones((1, D), jnp.float32), ln2_b=jnp.zeros((1, D), jnp.float32),
            w_fc1=xavier(next(ki), Hm, D).T, b_fc1=jnp.zeros((1, Hm), jnp.float32),
            w_fc2=xavier(next(ki), D, Hm).T, b_fc2=jnp.zeros((1, D), jnp.float32),
        ))
    # stack per-layer params along a leading layer dim for the fused kernel
    params["blocks"] = {k: jnp.stack([bl[k] for bl in per_layer], axis=0)
                        for k in per_layer[0]}
    return params


# =============================================================================
if __name__ == "__main__":
    # Small, lane-dense demo shapes consistent with the module
    # (real model: img 224 / audio spec, patch 16, embed_dim 612, depth 12, heads 12).
    B = 4
    in_chans = 1
    img_size = 32          # -> 2x2 = 4 patches, seq len 5 (padded to 8)
    patch_size = 16        # P = 256
    embed_dim = 128        # multiple of 128 (lane-dense)
    depth = 2
    num_heads = 4          # head_dim = 32
    mlp_ratio = 4.0        # MLP hidden = 512
    eps = 1e-6
    tb = 2                 # batch items per grid step (parallel axis has B//tb=2 steps)

    key = jax.random.PRNGKey(0)
    k_param, k_img = jax.random.split(key)
    params = init_mae_params(k_param, img_size=img_size, patch_size=patch_size,
                             in_chans=in_chans, embed_dim=embed_dim, depth=depth,
                             num_heads=num_heads, mlp_ratio=mlp_ratio)
    imgs = jax.random.normal(k_img, (B, in_chans, img_size, img_size),
                             dtype=jnp.float32)

    emb = mae_encoder_forward(imgs, params, patch_size=patch_size,
                              num_heads=num_heads, eps=eps, tb=tb)
    emb = jax.block_until_ready(emb)
    assert emb.shape == (B, embed_dim)

    ref = mae_encoder_forward_ref(imgs, params, patch_size=patch_size,
                                  num_heads=num_heads, eps=eps)
    ref = jax.block_until_ready(ref)

    err = float(jnp.max(jnp.abs(emb - ref)))
    # bf16 matmul operands in kernel AND reference; residual diff comes mainly
    # from the approximate softmax reciprocal and accumulation order.
    assert err < 2e-2, f"mismatch vs JAX reference: max abs err = {err}"
    print("KERNEL_OK")
</pallas_src>

<mosaic_0001>
module attributes {stable_mosaic.version = 11 : i64} {
  func.func @_patch_embed_kernel(%arg0: i32, %arg1: memref<2x4x256xbf16, #tpu.memory_space<vmem>>, %arg2: memref<256x128xbf16, #tpu.memory_space<vmem>>, %arg3: memref<8x128xf32, #tpu.memory_space<vmem>>, %arg4: memref<2x8x128xf32, #tpu.memory_space<vmem>>) attributes {dimension_semantics = [#tpu.dimension_semantics<parallel>], iteration_bounds = array<i64: 2>, scalar_prefetch = 0 : i64, scratch_operands = 0 : i64, tpu.core_type = #tpu.core_type<tc>, window_params = [{transform_indices = @transform_0, window_bounds = array<i64: 2, 4, 256>}, {pipeline_mode = #tpu.pipeline_mode<synchronous>, transform_indices = @transform_1, window_bounds = array<i64: 256, 128>}, {pipeline_mode = #tpu.pipeline_mode<synchronous>, transform_indices = @transform_2, window_bounds = array<i64: 8, 128>}, {transform_indices = @transform_3, window_bounds = array<i64: 2, 8, 128>}]} {
    %c0 = arith.constant 0 : index
    %c0_0 = arith.constant 0 : index
    %c0_1 = arith.constant 0 : index
    %0 = vector.load %arg1[%c0, %c0_0, %c0_1] : memref<2x4x256xbf16, #tpu.memory_space<vmem>>, vector<2x4x256xbf16>
    %1 = vector.shape_cast %0 : vector<2x4x256xbf16> to vector<8x256xbf16>
    %c0_2 = arith.constant 0 : index
    %c0_3 = arith.constant 0 : index
    %2 = vector.load %arg2[%c0_2, %c0_3] : memref<256x128xbf16, #tpu.memory_space<vmem>>, vector<256x128xbf16>
    %cst = arith.constant dense<0.000000e+00> : vector<8x128xf32>
    %3 = tpu.matmul %1, %2, %cst {dimension_numbers = #tpu.dot_dimension_numbers<[1], [0], [0], [1], [0, 0, 1, 1], [], []>} : vector<8x256xbf16>, vector<256x128xbf16>, vector<8x128xf32> -> vector<8x128xf32>
    %4 = vector.shape_cast %3 : vector<8x128xf32> to vector<2x4x128xf32>
    %c0_4 = arith.constant 0 : index
    %c0_5 = arith.constant 0 : index
    %5 = vector.load %arg3[%c0_4, %c0_5] : memref<8x128xf32, #tpu.memory_space<vmem>>, vector<8x128xf32>
    %6 = vector.extract_strided_slice %5 {offsets = [0, 0], sizes = [1, 128], strides = [1, 1]} : vector<8x128xf32> to vector<1x128xf32>
    %7 = vector.shape_cast %6 : vector<1x128xf32> to vector<1x1x128xf32>
    %8 = vector.shape_cast %7 : vector<1x1x128xf32> to vector<1x1x128xf32>
    %9 = vector.broadcast %8 : vector<1x1x128xf32> to vector<2x1x128xf32>
    %10 = vector.extract_strided_slice %5 {offsets = [1, 0], sizes = [4, 128], strides = [1, 1]} : vector<8x128xf32> to vector<4x128xf32>
    %11 = vector.shape_cast %10 : vector<4x128xf32> to vector<1x4x128xf32>
    %12 = vector.broadcast %11 : vector<1x4x128xf32> to vector<2x4x128xf32>
    %13 = arith.addf %4, %12 : vector<2x4x128xf32>
    %cst_6 = arith.constant 0.000000e+00 : f32
    %14 = vector.broadcast %cst_6 : f32 to vector<2x3x128xf32>
    %15 = tpu.concatenate %9, %13, %14 in 1 : vector<2x1x128xf32>, vector<2x4x128xf32>, vector<2x3x128xf32> -> vector<2x8x128xf32>
    %c0_7 = arith.constant 0 : index
    %c0_8 = arith.constant 0 : index
    %c0_9 = arith.constant 0 : index
    %16 = vector.load %arg4[%c0_7, %c0_8, %c0_9] : memref<2x8x128xf32, #tpu.memory_space<vmem>>, vector<2x8x128xf32>
    tpu.vector_store %arg4[%c0_7, %c0_8, %c0_9], %15 {strides = array<i32>} : memref<2x8x128xf32, #tpu.memory_space<vmem>>, vector<2x8x128xf32>,
    return
  }
  func.func @transform_0(%arg0: i32) -> (i32, i32, i32) {
    %c0_i32 = arith.constant 0 : i32
    %c0_i32_0 = arith.constant 0 : i32
    %c0_i32_1 = arith.constant 0 : i32
    return %arg0, %c0_i32, %c0_i32_0 : i32, i32, i32
  }
  func.func @transform_1(%arg0: i32) -> (i32, i32) {
    %c0_i32 = arith.constant 0 : i32
    %c0_i32_0 = arith.constant 0 : i32
    %c0_i32_1 = arith.constant 0 : i32
    return %c0_i32, %c0_i32_0 : i32, i32
  }
  func.func @transform_2(%arg0: i32) -> (i32, i32) {
    %c0_i32 = arith.constant 0 : i32
    %c0_i32_0 = arith.constant 0 : i32
    %c0_i32_1 = arith.constant 0 : i32
    return %c0_i32, %c0_i32_0 : i32, i32
  }
  func.func @transform_3(%arg0: i32) -> (i32, i32, i32) {
    %c0_i32 = arith.constant 0 : i32
    %c0_i32_0 = arith.constant 0 : i32
    %c0_i32_1 = arith.constant 0 : i32
    return %arg0, %c0_i32, %c0_i32_0 : i32, i32, i32
  }
}

</mosaic_0001>

<llo_original>
// kernel: tpu_custom_call.1
$region0: #{tpu_custom_call.1}
  #allocation0 [shape = 'u32[]', space=smem, size = 0x4, offset = 0x4, fixed_abs, tag = 'smem constant byte address 0x4 - core index']
  #allocation1 [shape = 'u32[144,128]{1,0:T(1,128)}', space=vmem, size = 0x12000, scoped, tag = 'internal scratch']
  %s0 = inlined_call_operand.hbm [shape: bf16[4,4,256], index: 0, kind: input, shape index: {}]
  %s1 = inlined_call_operand.hbm [shape: bf16[256,128], index: 1, kind: input, shape index: {}]
  %s2 = inlined_call_operand.hbm [shape: f32[8,128], index: 2, kind: input, shape index: {}]
  %s3 = inlined_call_operand.hbm [shape: f32[4,8,128], index: 3, kind: output, shape index: {}]
  %s4 = sld [smem:[#allocation0]]
  $region57: #{tpu_custom_call.1} parent=0
    _
  %s6 = ssub.s32 1, %s4
  %s7 = scalar_select 0, %s6, %s4
  $region1: #{tpu_custom_call.1} parent=0
    #allocation2 [shape = 'u8[8192]{0}', space=vmem, size = 0x2000, scoped, tag = 'input window, operand 0']
    #allocation3 [shape = 's32[2]{0}', space=sflag, size = 0x8, scoped, tag = 'scoped memory for tpu_custom_call.1']
    #allocation4 [shape = 's32[2]{0}', space=sflag, size = 0x8, scoped, tag = 'scoped memory for tpu_custom_call.1']
    #allocation5 [shape = 'u8[65536]{0}', space=vmem, size = 0x10000, scoped, tag = 'input window, operand 1, single buffered']
    #allocation6 [shape = 's32[1]{0}', space=sflag, size = 0x4, scoped, tag = 'scoped memory for tpu_custom_call.1']
    #allocation7 [shape = 'u8[4096]{0}', space=vmem, size = 0x1000, scoped, tag = 'input window, operand 2, single buffered']
    #allocation8 [shape = 'u8[16384]{0}', space=vmem, size = 0x4000, scoped, tag = 'output window, operand 0']
    %8 = vsyncpa [#allocation3], 0
    %s9 = scalar_lea.sflag [#allocation3], 1
    %10 = vsyncpa %s9, 0
    %11 = vsyncpa [#allocation6], 0
    %12 = vsyncpa [#allocation4], 0
    %s13 = scalar_lea.sflag [#allocation4], 1
    %14 = vsyncpa %s13, 0
    loop: start=0, step=1, limit=4
    $region2: #{tpu_custom_call.1} parent=1 // loop_pre_header
      _
    $region3: #{tpu_custom_call.1} parent=1 // loop_header
      %s16 = sphi 0, %s20
      %p17 = scmp.ge.s32.totalorder %s16, 4
      %s26 = sphi 0, %s28
      %s29 = sphi 0, %s26
      %s30 = sphi 0, %s29
      %s46 = sphi 0, %s30
      %s50 = sphi 0, %s50
      %s52 = sphi 0, %s50
      %s53 = sphi 0, %s52
      %s67 = sphi 0, %s53
      %s71 = sphi 0, %s71
      %s73 = sphi 0, %s71
      %s74 = sphi 0, %s73
      %s88 = sphi 0, %s74
      %s94 = sphi 0, %s96
      %s97 = sphi 0, %s94
      %s98 = sphi 0, %s97
      %s114 = sphi 0, %s98
    $region4: #{tpu_custom_call.1} parent=1 // loop_header_branch
      %19 = sbr.rel (%p17) target = $region8
    $region5: #{tpu_custom_call.1} parent=1 // loop_body
      %s21 = ssub.s32 %s16, 1
      %s22 = ssub.s32 %s16, 2
      %s23 = sadd.s32 %s16, 1
      %s24 = ssub.s32 %s16, %s23
      %p25 = scmp.eq.s32.totalorder %s24, 0
      %s27 = sadd.s32 %s26, 1
      %s28 = scalar_select %p25, %s26, %s27
      %p31 = pneg %p25
      %p32 = scmp.eq.s32.totalorder %s16, 1
      %p33 = por %p31, %p32
      %p34 = scmp.ne.s32.totalorder %s26, %s29
      %p35 = scmp.eq.s32.totalorder %s16, 0
      %p36 = por %p34, %p35
      %p37 = scmp.ne.s32.totalorder %s26, %s29
      %p38 = scmp.eq.s32.totalorder %s21, 1
      %p39 = por %p37, %p38
      %p40 = scmp.ne.s32.totalorder %s29, %s30
      %p41 = scmp.eq.s32.totalorder %s21, 0
      %p42 = por %p40, %p41
      %p43 = scmp.ne.s32.totalorder %s29, %s30
      %p44 = scmp.eq.s32.totalorder %s22, 1
      %p45 = por %p43, %p44
      %p47 = scmp.ne.s32.totalorder %s30, %s46
      %p48 = scmp.eq.s32.totalorder %s22, 0
      %p49 = por %p47, %p48
      %s51 = sadd.s32 %s50, 1
      %p54 = scmp.eq.s32.totalorder %s16, 1
      %p55 = scmp.ne.s32.totalorder %s50, %s52
      %p56 = scmp.eq.s32.totalorder %s16, 0
      %p57 = por %p55, %p56
      %p58 = scmp.ne.s32.totalorder %s50, %s52
      %p59 = scmp.eq.s32.totalorder %s21, 1
      %p60 = por %p58, %p59
      %p61 = scmp.ne.s32.totalorder %s52, %s53
      %p62 = scmp.eq.s32.totalorder %s21, 0
      %p63 = por %p61, %p62
      %p64 = scmp.ne.s32.totalorder %s52, %s53
      %p65 = scmp.eq.s32.totalorder %s22, 1
      %p66 = por %p64, %p65
      %p68 = scmp.ne.s32.totalorder %s53, %s67
      %p69 = scmp.eq.s32.totalorder %s22, 0
      %p70 = por %p68, %p69
      %s72 = sadd.s32 %s71, 1
      %p75 = scmp.eq.s32.totalorder %s16, 1
      %p76 = scmp.ne.s32.totalorder %s71, %s73
      %p77 = scmp.eq.s32.totalorder %s16, 0
      %p78 = por %p76, %p77
      %p79 = scmp.ne.s32.totalorder %s71, %s73
      %p80 = scmp.eq.s32.totalorder %s21, 1
      %p81 = por %p79, %p80
      %p82 = scmp.ne.s32.totalorder %s73, %s74
      %p83 = scmp.eq.s32.totalorder %s21, 0
      %p84 = por %p82, %p83
      %p85 = scmp.ne.s32.totalorder %s73, %s74
      %p86 = scmp.eq.s32.totalorder %s22, 1
      %p87 = por %p85, %p86
      %p89 = scmp.ne.s32.totalorder %s74, %s88
      %p90 = scmp.eq.s32.totalorder %s22, 0
      %p91 = por %p89, %p90
      %s92 = ssub.s32 %s16, %s23
      %p93 = scmp.eq.s32.totalorder %s92, 0
      %s95 = sadd.s32 %s94, 1
      %s96 = scalar_select %p93, %s94, %s95
      %p99 = pneg %p93
      %p100 = scmp.eq.s32.totalorder %s16, 1
      %p101 = por %p99, %p100
      %p102 = scmp.ne.s32.totalorder %s94, %s97
      %p103 = scmp.eq.s32.totalorder %s16, 0
      %p104 = por %p102, %p103
      %p105 = scmp.ne.s32.totalorder %s94, %s97
      %p106 = scmp.eq.s32.totalorder %s21, 1
      %p107 = por %p105, %p106
      %p108 = scmp.ne.s32.totalorder %s97, %s98
      %p109 = scmp.eq.s32.totalorder %s21, 0
      %p110 = por %p108, %p109
      %p111 = scmp.ne.s32.totalorder %s97, %s98
      %p112 = scmp.eq.s32.totalorder %s22, 1
      %p113 = por %p111, %p112
      %p115 = scmp.ne.s32.totalorder %s98, %s114
      %p116 = scmp.eq.s32.totalorder %s22, 0
      %p117 = por %p115, %p116
      %p118 = scmp.le.s32.totalorder 1, %s16
      %p119 = scmp.lt.s32.totalorder %s16, 3
      %p120 = pnand %p118, %p119
      %p121 = pneg %p120
      // Predicated region
      $region9: #{tpu_custom_call.1} parent=5 // pred_check
        _
      $region10: #{tpu_custom_call.1} parent=5 // pred_check_branch
        %123 = sbr.rel (%p120) target = $region12
      $region11: #{tpu_custom_call.1} parent=5 // pred_region
        %s124 = ssub.s32 %s16, 1
        // Predicated region
        $region13: #{tpu_custom_call.1} parent=11 // pred_check
          %p125 = pneg %p63
        $region14: #{tpu_custom_call.1} parent=11 // pred_check_branch
          %127 = sbr.rel (%p125) target = $region16
        $region15: #{tpu_custom_call.1} parent=11 // pred_region
          %s129 = ssub.s32 2048, 2048
          %130 = vsyncadd [#allocation6], %s129
          %s131 = sshll.u32 [#allocation5], 4
          %s132 = int_to_ptr.vmem [resolvable:$true] %s131
          %137 = dma.hbm_to_vmem [thread:$0]  %s1, 2048, %s132, [#allocation6], 64, 64, 4
        $region16: #{tpu_custom_call.1} parent=11 // pred_fallthru
          _
        // Predicated region
        $region17: #{tpu_custom_call.1} parent=11 // pred_check
          %p138 = pneg %p84
        $region18: #{tpu_custom_call.1} parent=11 // pred_check_branch
          %140 = sbr.rel (%p138) target = $region20
        $region19: #{tpu_custom_call.1} parent=11 // pred_region
          %s142 = ssub.s32 128, 128
          %143 = vsyncadd [#allocation6], %s142
          %s145 = sshll.u32 [#allocation7], 4
          %s146 = int_to_ptr.vmem [resolvable:$true] %s145
          %148 = dma.hbm_to_vmem [thread:$0]  %s2, 128, %s146, [#allocation6]
        $region20: #{tpu_custom_call.1} parent=11 // pred_fallthru
          _
      $region12: #{tpu_custom_call.1} parent=5 // pred_fallthru
        _
      %p149 = scmp.lt.s32.totalorder %s16, 2
      // Predicated region
      $region21: #{tpu_custom_call.1} parent=5 // pred_check
        %p150 = pneg %p149
      $region22: #{tpu_custom_call.1} parent=5 // pred_check_branch
        %152 = sbr.rel (%p150) target = $region24
      $region23: #{tpu_custom_call.1} parent=5 // pred_region
        // Predicated region
        $region25: #{tpu_custom_call.1} parent=23 // pred_check
          %p153 = pneg %p36
        $region26: #{tpu_custom_call.1} parent=23 // pred_check_branch
          %155 = sbr.rel (%p153) target = $region28
        $region27: #{tpu_custom_call.1} parent=23 // pred_region
          %s156 = sand.u32 %s26, 1
          %s157 = scalar_lea.sflag [#allocation3], %s156
          %s158 = sand.u32 %s26, 1
          %s159 = smul.addr %s158, 8
          %s160 = scalar_lea.vmem [#allocation2], %s159
          %s161 = smul.u32 2, %s16
          %s163 = ssub.s32 128, 128
          %164 = vsyncadd %s157, %s163
          %s165 = smul.addr %s161, 2
          %s166 = smul.addr %s165, 32
          %s167 = scalar_lea.hbm %s0, %s166
          %s168 = sshll.u32 %s160, 4
          %s169 = int_to_ptr.vmem [resolvable:$true] %s168
          %174 = dma.hbm_to_vmem [thread:$0]  %s167, 128, %s169, %s157, 64, 64, 4
        $region28: #{tpu_custom_call.1} parent=23 // pred_fallthru
          _
      $region24: #{tpu_custom_call.1} parent=5 // pred_fallthru
        _
      %p175 = scmp.le.s32.totalorder 1, %s16
      %p176 = scmp.lt.s32.totalorder %s16, 3
      %p177 = pnand %p175, %p176
      %p178 = pneg %p177
      // Predicated region
      $region29: #{tpu_custom_call.1} parent=5 // pred_check
        _
      $region30: #{tpu_custom_call.1} parent=5 // pred_check_branch
        %180 = sbr.rel (%p177) target = $region32
      $region31: #{tpu_custom_call.1} parent=5 // pred_region
        %s181 = ssub.s32 %s16, 1
        %s182 = sand.u32 %s29, 1
        %s183 = scalar_lea.sflag [#allocation3], %s182
        %s184 = sand.u32 %s29, 1
        %s185 = smul.addr %s184, 8
        %s186 = scalar_lea.vmem [#allocation2], %s185
        // Predicated region
        $region33: #{tpu_custom_call.1} parent=31 // pred_check
          %p187 = pneg %p42
        $region34: #{tpu_custom_call.1} parent=31 // pred_check_branch
          %189 = sbr.rel (%p187) target = $region36
        $region35: #{tpu_custom_call.1} parent=31 // pred_region
          %190 = dma.done %s183, 128
        $region36: #{tpu_custom_call.1} parent=31 // pred_fallthru
          _
        // Predicated region
        $region37: #{tpu_custom_call.1} parent=31 // pred_check
          %p191 = pneg %p63
        $region38: #{tpu_custom_call.1} parent=31 // pred_check_branch
          %193 = sbr.rel (%p191) target = $region40
        $region39: #{tpu_custom_call.1} parent=31 // pred_region
          %194 = dma.done [#allocation6], 2048
        $region40: #{tpu_custom_call.1} parent=31 // pred_fallthru
          _
        // Predicated region
        $region41: #{tpu_custom_call.1} parent=31 // pred_check
          %p195 = pneg %p84
        $region42: #{tpu_custom_call.1} parent=31 // pred_check_branch
          %197 = sbr.rel (%p195) target = $region44
        $region43: #{tpu_custom_call.1} parent=31 // pred_region
          %198 = dma.done [#allocation6], 128
        $region44: #{tpu_custom_call.1} parent=31 // pred_fallthru
          _
        %s199 = sand.u32 %s29, 1
        %s200 = scalar_lea.sflag [#allocation3], %s199
        %s201 = sand.u32 %s29, 1
        %s202 = smul.addr %s201, 8
        %s203 = scalar_lea.vmem [#allocation2], %s202
        %p204 = pneg %p42
        %p205 = pneg %p39
        %p206 = pneg %p63
        %p207 = pneg %p60
        %p208 = pneg %p84
        %p209 = pneg %p81
        %p210 = pneg %p110
        %p211 = pneg %p107
        %s212 = sand.u32 %s97, 1
        %s213 = scalar_lea.sflag [#allocation4], %s212
        %s214 = sand.u32 %s97, 1
        %s215 = smul.addr %s214, 16
        %s216 = scalar_lea.vmem [#allocation8], %s215
        %s217 = smul.u32 2, %s21
        %s218 = smul.u32 2, %s21
        %v220 = vld [vmem:[%s186] sm:$0xf]
        %v221 = vld [vmem:[%s186 + $0x4] sm:$0xf]
        %v222 = vld [vmem:[#allocation5] sm:$0xf]
        %v223 = vld [vmem:[#allocation5 + $0x4] sm:$0xf]
        %v224 = vld [vmem:[#allocation5 + $0x8] sm:$0xf]
        %v225 = vld [vmem:[#allocation5 + $0xc] sm:$0xf]
        %v226 = vld [vmem:[#allocation5 + $0x10] sm:$0xf]
        %v227 = vld [vmem:[#allocation5 + $0x14] sm:$0xf]
        %v228 = vld [vmem:[#allocation5 + $0x18] sm:$0xf]
        %v229 = vld [vmem:[#allocation5 + $0x1c] sm:$0xf]
        %v230 = vld [vmem:[#allocation5 + $0x20] sm:$0xf]
        %v231 = vld [vmem:[#allocation5 + $0x24] sm:$0xf]
        %v232 = vld [vmem:[#allocation5 + $0x28] sm:$0xf]
        %v233 = vld [vmem:[#allocation5 + $0x2c] sm:$0xf]
        %v234 = vld [vmem:[#allocation5 + $0x30] sm:$0xf]
        %v235 = vld [vmem:[#allocation5 + $0x34] sm:$0xf]
        %v236 = vld [vmem:[#allocation5 + $0x38] sm:$0xf]
        %v237 = vld [vmem:[#allocation5 + $0x3c] sm:$0xf]
        %v238 = vld [vmem:[#allocation5 + $0x40] sm:$0xf]
        %v239 = vld [vmem:[#allocation5 + $0x44] sm:$0xf]
        %v240 = vld [vmem:[#allocation5 + $0x48] sm:$0xf]
        %v241 = vld [vmem:[#allocation5 + $0x4c] sm:$0xf]
        %v242 = vld [vmem:[#allocation5 + $0x50] sm:$0xf]
        %v243 = vld [vmem:[#allocation5 + $0x54] sm:$0xf]
        %v244 = vld [vmem:[#allocation5 + $0x58] sm:$0xf]
        %v245 = vld [vmem:[#allocation5 + $0x5c] sm:$0xf]
        %v246 = vld [vmem:[#allocation5 + $0x60] sm:$0xf]
        %v247 = vld [vmem:[#allocation5 + $0x64] sm:$0xf]
        %v248 = vld [vmem:[#allocation5 + $0x68] sm:$0xf]
        %v249 = vld [vmem:[#allocation5 + $0x6c] sm:$0xf]
        %v250 = vld [vmem:[#allocation5 + $0x70] sm:$0xf]
        %v251 = vld [vmem:[#allocation5 + $0x74] sm:$0xf]
        %v252 = vld [vmem:[#allocation5 + $0x78] sm:$0xf]
        %v253 = vld [vmem:[#allocation5 + $0x7c] sm:$0xf]
        %v256 = vcombine.low %v220, %v221
        %v258 = vunpack.c.l.s4 1983009808
        %v259 = vunpack.c.0.s8 %v258
        %v260 = vlaneseq
        %v261 = vshrl.u32 %v260, 7
        %v262 = vsub.s32 %v259, %v261
        %v263 = vrot.slane %v256, %v262
        %v264 = vcombine.high %v263, %v263
        %v299 = vunpack.c.l.b16 %v222
        %v300 = vunpack.c.l.b16 %v223
        %v301 = vunpack.c.l.b16 %v224
        %v302 = vunpack.c.l.b16 %v225
        %v303 = vunpack.c.l.b16 %v226
        %v304 = vunpack.c.l.b16 %v227
        %v305 = vunpack.c.l.b16 %v228
        %v306 = vunpack.c.l.b16 %v229
        %v307 = vunpack.c.l.b16 %v230
        %v308 = vunpack.c.l.b16 %v231
        %v309 = vunpack.c.l.b16 %v232
        %v310 = vunpack.c.l.b16 %v233
        %v311 = vunpack.c.l.b16 %v234
        %v312 = vunpack.c.l.b16 %v235
        %v313 = vunpack.c.l.b16 %v236
        %v314 = vunpack.c.l.b16 %v237
        %v315 = vunpack.c.l.b16 %v238
        %v316 = vunpack.c.l.b16 %v239
        %v317 = vunpack.c.l.b16 %v240
        %v318 = vunpack.c.l.b16 %v241
        %v319 = vunpack.c.l.b16 %v242
        %v320 = vunpack.c.l.b16 %v243
        %v321 = vunpack.c.l.b16 %v244
        %v322 = vunpack.c.l.b16 %v245
        %v323 = vunpack.c.l.b16 %v246
        %v324 = vunpack.c.l.b16 %v247
        %v325 = vunpack.c.l.b16 %v248
        %v326 = vunpack.c.l.b16 %v249
        %v327 = vunpack.c.l.b16 %v250
        %v328 = vunpack.c.l.b16 %v251
        %v329 = vunpack.c.l.b16 %v252
        %v330 = vunpack.c.l.b16 %v253
        %v331 = vpack.c.b16 %v300, %v299
        %v332 = vpack.c.b16 %v302, %v301
        %v333 = vpack.c.b16 %v304, %v303
        %v334 = vpack.c.b16 %v306, %v305
        %v335 = vpack.c.b16 %v308, %v307
        %v336 = vpack.c.b16 %v310, %v309
        %v337 = vpack.c.b16 %v312, %v311
        %v338 = vpack.c.b16 %v314, %v313
        %v339 = vpack.c.b16 %v316, %v315
        %v340 = vpack.c.b16 %v318, %v317
        %v341 = vpack.c.b16 %v320, %v319
        %v342 = vpack.c.b16 %v322, %v321
        %v343 = vpack.c.b16 %v324, %v323
        %v344 = vpack.c.b16 %v326, %v325
        %v345 = vpack.c.b16 %v328, %v327
        %v346 = vpack.c.b16 %v330, %v329
        %363 = vmatprep.subr.bf16.mxu0 0
        %364 = vmatpush1.bf16.msra.mxu0 %v331
        %365 = vmatprep.subr.bf16.mxu0 0
        %366 = vmatpush1.bf16.msra.mxu0 %v332
        %367 = vmatprep.subr.bf16.mxu0 0
        %368 = vmatpush1.bf16.msra.mxu0 %v333
        %369 = vmatprep.subr.bf16.mxu0 0
        %370 = vmatpush1.bf16.msra.mxu0 %v334
        %371 = vmatprep.subr.bf16.mxu0 0
        %372 = vmatpush1.bf16.msra.mxu0 %v335
        %373 = vmatprep.subr.bf16.mxu0 0
        %374 = vmatpush1.bf16.msra.mxu0 %v336
        %375 = vmatprep.subr.bf16.mxu0 0
        %376 = vmatpush1.bf16.msra.mxu0 %v337
        %377 = vmatprep.subr.bf16.mxu0 0
        %378 = vmatpush1.bf16.msra.mxu0 %v338
        %379 = vmatprep.subr.bf16.mxu0 0
        %380 = vmatpush1.bf16.msra.mxu0 %v339
        %381 = vmatprep.subr.bf16.mxu0 0
        %382 = vmatpush1.bf16.msra.mxu0 %v340
        %383 = vmatprep.subr.bf16.mxu0 0
        %384 = vmatpush1.bf16.msra.mxu0 %v341
        %385 = vmatprep.subr.bf16.mxu0 0
        %386 = vmatpush1.bf16.msra.mxu0 %v342
        %387 = vmatprep.subr.bf16.mxu0 0
        %388 = vmatpush1.bf16.msra.mxu0 %v343
        %389 = vmatprep.subr.bf16.mxu0 0
        %390 = vmatpush1.bf16.msra.mxu0 %v344
        %391 = vmatprep.subr.bf16.mxu0 0
        %392 = vmatpush1.bf16.msra.mxu0 %v345
        %393 = vmatprep.subr.bf16.mxu0 0
        %394 = vmatpush1.bf16.msra.mxu0 %v346
        %395 = vmatprep.mubr.bf16.mxu0 %v264
        %396 = vmatmul.mubr.bf16.gmra.mrb[0].mxu0 %v263
        %v397 = vpop.f32.mrb[0].mxu0
        %v398 = vadd.f32 0.0, %v397
        %v399 = vpop.f32.mrb[0].mxu0
        %v400 = vpop.f32.mrb[0].mxu0
        %v401 = vpop.f32.mrb[0].mxu0
        %402 = vdwg.mxu0
        %v404 = vcombine.high %v398, %v398
        %v406 = vld [vmem:[#allocation7] sm:$0xff]
        %v408 = vcombine.high %v406, %v406
        %vm409 = vcmask 1042432
        %vm410 = vcmask 1046532
        %vm411 = vmor %vm409, %vm410
        %v412 = vrot.slane %v406, 5
        %v413 = vrot.slane %v412, 4
        %v414 = vrot.slane %v408, 5
        %v415 = vsel %vm411, %v413, %v414
        %v417 = vadd.f32 %v398, %v415
        %v418 = vadd.f32 %v404, %v415
        %v421 = vrot.slane %v417, 7
        %v422 = vrot.slane %v418, 7
        %vm425 = vcmask 1040384
        %v426 = vsel %vm425, %v406, %v421
        %v427 = vsel %vm425, %v406, %v422
        %vm428 = vcmask 1044480
        %v429 = vsel %vm428, %v426, 0.0
        %v430 = vsel %vm428, %v427, 0.0
        %431 = vst [vmem:[%s216] sm:$0xff] %v429
        %432 = vst [vmem:[%s216 + $0x8] sm:$0xff] %v430
        %s433 = sand.u32 %s97, 1
        %s434 = scalar_lea.sflag [#allocation4], %s433
        %s435 = sand.u32 %s97, 1
        %s436 = smul.addr %s435, 16
        %s437 = scalar_lea.vmem [#allocation8], %s436
        // Predicated region
        $region45: #{tpu_custom_call.1} parent=31 // pred_check
          %p438 = pneg %p107
        $region46: #{tpu_custom_call.1} parent=31 // pred_check_branch
          %440 = sbr.rel (%p438) target = $region48
        $region47: #{tpu_custom_call.1} parent=31 // pred_region
          %s441 = smul.u32 2, %s21
          %s443 = ssub.s32 256, 256
          %444 = vsyncadd %s434, %s443
          %s445 = smul.addr %s441, 128
          %s446 = scalar_lea.hbm %s3, %s445
          %s447 = sshll.u32 %s437, 4
          %s448 = int_to_ptr.vmem [resolvable:$true] %s447
          %453 = dma.vmem_to_hbm [thread:$0]  %s448, 256, %s446, %s434, 128, 128, 8
        $region48: #{tpu_custom_call.1} parent=31 // pred_fallthru
          _
      $region32: #{tpu_custom_call.1} parent=5 // pred_fallthru
        _
      %p454 = scmp.le.s32.totalorder 2, %s16
      // Predicated region
      $region49: #{tpu_custom_call.1} parent=5 // pred_check
        %p455 = pneg %p454
      $region50: #{tpu_custom_call.1} parent=5 // pred_check_branch
        %457 = sbr.rel (%p455) target = $region52
      $region51: #{tpu_custom_call.1} parent=5 // pred_region
        %s458 = ssub.s32 %s16, 2
        // Predicated region
        $region53: #{tpu_custom_call.1} parent=51 // pred_check
          %p459 = pneg %p113
        $region54: #{tpu_custom_call.1} parent=51 // pred_check_branch
          %461 = sbr.rel (%p459) target = $region56
        $region55: #{tpu_custom_call.1} parent=51 // pred_region
          %s462 = sand.u32 %s98, 1
          %s463 = scalar_lea.sflag [#allocation4], %s462
          %s464 = sand.u32 %s98, 1
          %s465 = smul.addr %s464, 16
          %s466 = scalar_lea.vmem [#allocation8], %s465
          %467 = dma.done %s463, 256
        $region56: #{tpu_custom_call.1} parent=51 // pred_fallthru
          _
      $region52: #{tpu_custom_call.1} parent=5 // pred_fallthru
        _
    $region6: #{tpu_custom_call.1} parent=1 // loop_footer
      %s20 = sadd.s32 1, %s16
    $region7: #{tpu_custom_call.1} parent=1 // loop_footer_branch
      %15 = sbr.rel target = $region3
    $region8: #{tpu_custom_call.1} parent=1 // loop_exit
      _
    %468 = vsyncpa [#allocation3], 1
    %s469 = scalar_lea.sflag [#allocation3], 1
    %470 = vsyncpa %s469, 1
    %471 = vsyncpa [#allocation6], 1
    %472 = vsyncpa [#allocation4], 1
    %s473 = scalar_lea.sflag [#allocation4], 1
    %474 = vsyncpa %s473, 1

</llo_original>
